<compile_context>
chip_gen: v7x
topology: tpu7x:2x2x1
jax: 0.10.0
libtpu: 0.0.40
codegen_flags: <defaults>
</compile_context>

<pallas_src>
import jax
import jax.numpy as jnp
from jax import lax
from jax.experimental import pallas as pl
from jax.experimental.pallas import tpu as pltpu


def _make_kernel(soft_local_max_size, c, h, w):
    k = soft_local_max_size
    pad = k // 2
    n = h * w
    pw = pad * w

    def kernel(col_masks_ref, col_corr_ref, x_ref, o_ref, row_scr):
        # Compute in f32 regardless of input dtype; cast only at the store.
        x = x_ref[0].astype(jnp.float32)           # (C, N), N = H*W row-major
        x = jnp.maximum(x, 0.0)                    # F.relu(batch)

        # exp(batch / max_per_sample) via reciprocal-multiply (within 1e-5).
        inv_m = 1.0 / jnp.max(x)
        exp = jnp.exp(x * inv_m)

        # ---- separable k x k box sum with constant-1.0 padding -------------
        # Column pass: small in-vreg lane rotations + host-precomputed masks.
        col_masks = col_masks_ref[...]             # (k-1, N) f32 in {0, 1}
        col_corr = col_corr_ref[...]               # (1, N) f32: # of 1.0 pads
        col_sum = exp + col_corr
        t = 0
        for dj in range(-pad, pad + 1):
            if dj == 0:
                continue
            rolled = pltpu.roll(exp, (-dj) % n, axis=1)
            col_sum = col_sum + col_masks[t:t + 1, :] * rolled
            t += 1

        # Row pass: padded VMEM scratch -> k-1 static slice loads + adds.
        # A fully-padded row of 1.0s contributes exactly k after the column
        # pass, so the pad regions hold float(k).
        pad_fill = jnp.full((c, pw), float(k), dtype=jnp.float32)
        row_scr[:, 0:pw] = pad_fill                # top pad rows
        row_scr[:, pw + n:] = pad_fill             # bottom pad rows
        row_scr[:, pw:pw + n] = col_sum            # interior
        sum_exp = col_sum                          # center tap (tt == pad)
        for tt in range(k):
            if tt == pad:
                continue
            sum_exp = sum_exp + row_scr[:, tt * w:tt * w + n]

        # ---- fused score algebra --------------------------------------------
        # all_scores = (exp / sum_exp) * (x / depth_wise_max); depth_wise_max
        # is channel-independent so it factors out of the channel max, which
        # drops one full (C, N) divide and the (1, N)->(C, N) broadcast.
        inv_sum = pl.reciprocal(sum_exp, approx=False)  # approx=True breaks 1e-5
        numer = jnp.max(exp * x * inv_sum, axis=0, keepdims=True)   # (1, N)
        depth_wise_max = jnp.max(x, axis=0, keepdims=True)          # (1, N)
        score = numer / depth_wise_max
        score = score * (1.0 / jnp.sum(score))     # per-sample normalization
        o_ref[0] = score.astype(o_ref.dtype)

    return kernel


def soft_detection(x, soft_local_max_size=3):
    """Pallas implementation of SoftDetectionModule.forward.  x: (B, C, H, W)."""
    b, c, h, w = x.shape
    k = soft_local_max_size
    pad = k // 2
    n = h * w
    pw = pad * w
    x_flat = x.reshape(b, c, n)                    # lane-dense last dim

    # Host-precomputed column-tap validity masks and the additive padding
    # correction (how many 1.0 pads each pixel picks up in the column pass).
    j = jnp.arange(n, dtype=jnp.int32) % w
    masks = []
    for dj in range(-pad, pad + 1):
        if dj == 0:
            continue
        masks.append(((j + dj >= 0) & (j + dj < w)).astype(jnp.float32))
    col_masks = jnp.stack(masks, axis=0)                                   # (k-1, N)
    col_corr = float(k - 1) - jnp.sum(col_masks, axis=0, keepdims=True)    # (1, N)

    # Generation-aware VMEM budget: double-buffered input block + live f32
    # temporaries + padded row scratch, capped at ~3/4 of physical VMEM.
    try:
        vmem_cap = int(pltpu.get_tpu_info().vmem_capacity_bytes)
    except Exception:  # conservative fallback if the query is unavailable
        vmem_cap = 64 << 20
    est = (2 * c * n * 4              # double-buffered input block
           + 10 * c * n * 4           # live (C, N) f32 temporaries
           + c * (n + 2 * pw) * 4     # padded row scratch
           + 8 * n * 4                # (1, N) temporaries / masks
           + (4 << 20))               # slack
    vmem_limit = int(min(max(est, 16 << 20), (vmem_cap * 3) // 4))

    cost = pl.CostEstimate(
        flops=(3 * k + 14) * b * c * n,
        transcendentals=b * c * n,
        bytes_accessed=(b * c * n + b * n + k * n) * 4,
    )

    out = pl.pallas_call(
        _make_kernel(soft_local_max_size, c, h, w),
        out_shape=jax.ShapeDtypeStruct((b, 1, n), x.dtype),
        grid=(b,),
        in_specs=[
            pl.BlockSpec((k - 1, n), lambda i: (0, 0)),   # column masks
            pl.BlockSpec((1, n), lambda i: (0, 0)),       # column pad correction
            pl.BlockSpec((1, c, n), lambda i: (i, 0, 0)),
        ],
        out_specs=pl.BlockSpec((1, 1, n), lambda i: (i, 0, 0)),
        scratch_shapes=[pltpu.VMEM((c, n + 2 * pw), jnp.float32)],
        compiler_params=pltpu.CompilerParams(
            dimension_semantics=("parallel",),
            vmem_limit_bytes=vmem_limit,
        ),
        cost_estimate=cost,
    )(col_masks, col_corr, x_flat)
    return out.reshape(b, h, w)


def soft_detection_ref(x, soft_local_max_size=3):
    """Pure-JAX reference mirroring the PyTorch forward exactly."""
    pad = soft_local_max_size // 2
    b = x.shape[0]
    x = jnp.maximum(x, 0.0)
    max_per_sample = jnp.max(x.reshape(b, -1), axis=1)
    exp = jnp.exp(x / max_per_sample[:, None, None, None])
    padded = jnp.pad(exp, ((0, 0), (0, 0), (pad, pad), (pad, pad)),
                     constant_values=1.0)
    sum_exp = lax.reduce_window(
        padded, 0.0, lax.add,
        (1, 1, soft_local_max_size, soft_local_max_size),
        (1, 1, 1, 1), "VALID")
    local_max_score = exp / sum_exp
    depth_wise_max = jnp.max(x, axis=1)
    depth_wise_max_score = x / depth_wise_max[:, None]
    all_scores = local_max_score * depth_wise_max_score
    score = jnp.max(all_scores, axis=1)
    score = score / jnp.sum(score.reshape(b, -1), axis=1)[:, None, None]
    return score


if __name__ == "__main__":
    key = jax.random.PRNGKey(0)
    # Positive inputs avoid the 0/0 NaNs the original PyTorch module itself
    # produces when every channel at a pixel is non-positive after ReLU.
    x = jax.random.uniform(key, (2, 4, 16, 16), dtype=jnp.float32,
                           minval=0.05, maxval=1.0)

    out = soft_detection(x)
    out = jax.block_until_ready(out)

    ref = soft_detection_ref(x)
    assert out.shape == (2, 16, 16), out.shape
    max_err = float(jnp.max(jnp.abs(out - ref)))
    assert jnp.allclose(out, ref, atol=1e-5, rtol=1e-5), max_err

    print("KERNEL_OK")
</pallas_src>

<mosaic_0001>
module attributes {stable_mosaic.version = 11 : i64} {
  func.func @kernel(%arg0: i32, %arg1: memref<2x256xf32, #tpu.memory_space<vmem>>, %arg2: memref<1x256xf32, #tpu.memory_space<vmem>>, %arg3: memref<1x4x256xf32, #tpu.memory_space<vmem>>, %arg4: memref<1x1x256xf32, #tpu.memory_space<vmem>>, %arg5: memref<4x288xf32, #tpu.memory_space<vmem>>) attributes {dimension_semantics = [#tpu.dimension_semantics<parallel>], iteration_bounds = array<i64: 2>, scalar_prefetch = 0 : i64, scratch_operands = 1 : i64, tpu.core_type = #tpu.core_type<tc>, window_params = [{pipeline_mode = #tpu.pipeline_mode<synchronous>, transform_indices = @transform_0, window_bounds = array<i64: 2, 256>}, {pipeline_mode = #tpu.pipeline_mode<synchronous>, transform_indices = @transform_1, window_bounds = array<i64: 1, 256>}, {transform_indices = @transform_2, window_bounds = array<i64: 1, 4, 256>}, {transform_indices = @transform_3, window_bounds = array<i64: 1, 1, 256>}]} {
    %c0 = arith.constant 0 : index
    %c0_0 = arith.constant 0 : index
    %c0_1 = arith.constant 0 : index
    %0 = vector.load %arg3[%c0, %c0_0, %c0_1] : memref<1x4x256xf32, #tpu.memory_space<vmem>>, vector<1x4x256xf32>
    %1 = vector.shape_cast %0 : vector<1x4x256xf32> to vector<4x256xf32>
    %cst = arith.constant 0.000000e+00 : f32
    %2 = vector.broadcast %cst : f32 to vector<4x256xf32>
    %3 = arith.maximumf %1, %2 : vector<4x256xf32>
    %4 = vector.shape_cast %3 : vector<4x256xf32> to vector<1x4x256xf32>
    %cst_2 = arith.constant dense<0xFF800000> : vector<1xf32>
    %5 = vector.multi_reduction <maximumf>, %4, %cst_2 [1, 2] : vector<1x4x256xf32> to vector<1xf32>
    %6 = vector.shape_cast %5 : vector<1xf32> to vector<1x1x1xf32>
    %7 = vector.extract %6[0, 0, 0] : f32 from vector<1x1x1xf32>
    %cst_3 = arith.constant 1.000000e+00 : f32
    %8 = arith.divf %cst_3, %7 : f32
    %9 = vector.broadcast %8 : f32 to vector<4x256xf32>
    %10 = arith.mulf %3, %9 : vector<4x256xf32>
    %11 = math.exp %10 : vector<4x256xf32>
    %c0_4 = arith.constant 0 : index
    %c0_5 = arith.constant 0 : index
    %12 = vector.load %arg1[%c0_4, %c0_5] : memref<2x256xf32, #tpu.memory_space<vmem>>, vector<2x256xf32>
    %c0_6 = arith.constant 0 : index
    %c0_7 = arith.constant 0 : index
    %13 = vector.load %arg2[%c0_6, %c0_7] : memref<1x256xf32, #tpu.memory_space<vmem>>, vector<1x256xf32>
    %14 = vector.broadcast %13 : vector<1x256xf32> to vector<4x256xf32>
    %15 = arith.addf %11, %14 : vector<4x256xf32>
    %c1_i32 = arith.constant 1 : i32
    %16 = tpu.dynamic_rotate %11 by %c1_i32 dim 1 : vector<4x256xf32>, i32 -> vector<4x256xf32>
    %17 = vector.extract_strided_slice %12 {offsets = [0, 0], sizes = [1, 256], strides = [1, 1]} : vector<2x256xf32> to vector<1x256xf32>
    %18 = vector.broadcast %17 : vector<1x256xf32> to vector<4x256xf32>
    %19 = arith.mulf %18, %16 : vector<4x256xf32>
    %20 = arith.addf %15, %19 : vector<4x256xf32>
    %c255_i32 = arith.constant 255 : i32
    %21 = tpu.dynamic_rotate %11 by %c255_i32 dim 1 : vector<4x256xf32>, i32 -> vector<4x256xf32>
    %22 = vector.extract_strided_slice %12 {offsets = [1, 0], sizes = [1, 256], strides = [1, 1]} : vector<2x256xf32> to vector<1x256xf32>
    %23 = vector.broadcast %22 : vector<1x256xf32> to vector<4x256xf32>
    %24 = arith.mulf %23, %21 : vector<4x256xf32>
    %25 = arith.addf %20, %24 : vector<4x256xf32>
    %cst_8 = arith.constant 3.000000e+00 : f32
    %26 = vector.broadcast %cst_8 : f32 to vector<4x16xf32>
    %c0_9 = arith.constant 0 : index
    %c0_10 = arith.constant 0 : index
    %27 = vector.load %arg5[%c0_9, %c0_10] : memref<4x288xf32, #tpu.memory_space<vmem>>, vector<4x16xf32>
    tpu.vector_store %arg5[%c0_9, %c0_10], %26 {strides = array<i32>} : memref<4x288xf32, #tpu.memory_space<vmem>>, vector<4x16xf32>,
    %c0_11 = arith.constant 0 : index
    %c272 = arith.constant 272 : index
    %28 = vector.load %arg5[%c0_11, %c272] : memref<4x288xf32, #tpu.memory_space<vmem>>, vector<4x16xf32>
    tpu.vector_store %arg5[%c0_11, %c272], %26 {strides = array<i32>} : memref<4x288xf32, #tpu.memory_space<vmem>>, vector<4x16xf32>,
    %c0_12 = arith.constant 0 : index
    %c16 = arith.constant 16 : index
    %29 = vector.load %arg5[%c0_12, %c16] : memref<4x288xf32, #tpu.memory_space<vmem>>, vector<4x256xf32>
    tpu.vector_store %arg5[%c0_12, %c16], %25 {strides = array<i32>} : memref<4x288xf32, #tpu.memory_space<vmem>>, vector<4x256xf32>,
    %c0_13 = arith.constant 0 : index
    %c0_14 = arith.constant 0 : index
    %30 = vector.load %arg5[%c0_13, %c0_14] : memref<4x288xf32, #tpu.memory_space<vmem>>, vector<4x256xf32>
    %31 = arith.addf %25, %30 : vector<4x256xf32>
    %c0_15 = arith.constant 0 : index
    %c32 = arith.constant 32 : index
    %32 = vector.load %arg5[%c0_15, %c32] : memref<4x288xf32, #tpu.memory_space<vmem>>, vector<4x256xf32>
    %33 = arith.addf %31, %32 : vector<4x256xf32>
    %34 = tpu.reciprocal %33 : vector<4x256xf32> -> vector<4x256xf32>
    %35 = arith.mulf %11, %3 : vector<4x256xf32>
    %36 = arith.mulf %35, %34 : vector<4x256xf32>
    %cst_16 = arith.constant dense<0xFF800000> : vector<256xf32>
    %37 = vector.multi_reduction <maximumf>, %36, %cst_16 [0] : vector<4x256xf32> to vector<256xf32>
    %38 = vector.shape_cast %37 : vector<256xf32> to vector<1x256xf32>
    %cst_17 = arith.constant dense<0xFF800000> : vector<256xf32>
    %39 = vector.multi_reduction <maximumf>, %3, %cst_17 [0] : vector<4x256xf32> to vector<256xf32>
    %40 = vector.shape_cast %39 : vector<256xf32> to vector<1x256xf32>
    %41 = arith.divf %38, %40 : vector<1x256xf32>
    %42 = vector.shape_cast %41 : vector<1x256xf32> to vector<1x1x256xf32>
    %cst_18 = arith.constant dense<0.000000e+00> : vector<1xf32>
    %43 = vector.multi_reduction <add>, %42, %cst_18 [1, 2] : vector<1x1x256xf32> to vector<1xf32>
    %44 = vector.shape_cast %43 : vector<1xf32> to vector<1x1x1xf32>
    %45 = vector.extract %44[0, 0, 0] : f32 from vector<1x1x1xf32>
    %cst_19 = arith.constant 1.000000e+00 : f32
    %46 = arith.divf %cst_19, %45 : f32
    %47 = vector.broadcast %46 : f32 to vector<1x256xf32>
    %48 = arith.mulf %41, %47 : vector<1x256xf32>
    %c0_20 = arith.constant 0 : index
    %c0_21 = arith.constant 0 : index
    %c0_22 = arith.constant 0 : index
    %49 = vector.load %arg4[%c0_20, %c0_21, %c0_22] : memref<1x1x256xf32, #tpu.memory_space<vmem>>, vector<1x1x256xf32>
    %50 = vector.shape_cast %49 : vector<1x1x256xf32> to vector<1x256xf32>
    %51 = vector.shape_cast %48 : vector<1x256xf32> to vector<1x1x256xf32>
    tpu.vector_store %arg4[%c0_20, %c0_21, %c0_22], %51 {strides = array<i32>} : memref<1x1x256xf32, #tpu.memory_space<vmem>>, vector<1x1x256xf32>,
    return
  }
  func.func @transform_0(%arg0: i32) -> (i32, i32) {
    %c0_i32 = arith.constant 0 : i32
    %c0_i32_0 = arith.constant 0 : i32
    %c0_i32_1 = arith.constant 0 : i32
    return %c0_i32, %c0_i32_0 : i32, i32
  }
  func.func @transform_1(%arg0: i32) -> (i32, i32) {
    %c0_i32 = arith.constant 0 : i32
    %c0_i32_0 = arith.constant 0 : i32
    %c0_i32_1 = arith.constant 0 : i32
    return %c0_i32, %c0_i32_0 : i32, i32
  }
  func.func @transform_2(%arg0: i32) -> (i32, i32, i32) {
    %c0_i32 = arith.constant 0 : i32
    %c0_i32_0 = arith.constant 0 : i32
    %c0_i32_1 = arith.constant 0 : i32
    return %arg0, %c0_i32, %c0_i32_0 : i32, i32, i32
  }
  func.func @transform_3(%arg0: i32) -> (i32, i32, i32) {
    %c0_i32 = arith.constant 0 : i32
    %c0_i32_0 = arith.constant 0 : i32
    %c0_i32_1 = arith.constant 0 : i32
    return %arg0, %c0_i32, %c0_i32_0 : i32, i32, i32
  }
}

</mosaic_0001>

<llo_original>
// kernel: tpu_custom_call.1
$region0: #{tpu_custom_call.1}
  #allocation0 [shape = 'u32[]', space=smem, size = 0x4, offset = 0x4, fixed_abs, tag = 'smem constant byte address 0x4 - core index']
  #allocation1 [shape = 'u32[144,128]{1,0:T(1,128)}', space=vmem, size = 0x12000, scoped, tag = 'internal scratch']
  #allocation2 [shape = 'f32[4,288]{1,0:T(4,128)}', space=vmem, size = 0x1800, scoped, tag = 'scratch operand']
  %s0 = inlined_call_operand.hbm [shape: f32[2,256], index: 0, kind: input, shape index: {}]
  %s1 = inlined_call_operand.vmem [shape: f32[1,256], index: 1, kind: input, shape index: {}]
  %s2 = inlined_call_operand.hbm [shape: f32[2,4,256], index: 2, kind: input, shape index: {}]
  %s3 = inlined_call_operand.hbm [shape: f32[2,1,256], index: 3, kind: output, shape index: {}]
  %s4 = sld [smem:[#allocation0]]
  $region53: #{tpu_custom_call.1} parent=0
    _
  %s6 = ssub.s32 1, %s4
  %s7 = scalar_select 0, %s6, %s4
  $region1: #{tpu_custom_call.1} parent=0
    #allocation3 [shape = 'u8[2048]{0}', space=vmem, size = 0x800, scoped, tag = 'input window, operand 0, single buffered']
    #allocation4 [shape = 's32[2]{0}', space=sflag, size = 0x8, scoped, tag = 'scoped memory for tpu_custom_call.1']
    #allocation5 [shape = 's32[2]{0}', space=sflag, size = 0x8, scoped, tag = 'scoped memory for tpu_custom_call.1']
    #allocation6 [shape = 'u8[8192]{0}', space=vmem, size = 0x2000, scoped, tag = 'input window, operand 2']
    #allocation7 [shape = 's32[2]{0}', space=sflag, size = 0x8, scoped, tag = 'scoped memory for tpu_custom_call.1']
    #allocation8 [shape = 'u8[2048]{0}', space=vmem, size = 0x800, scoped, tag = 'output window, operand 0']
    %8 = vsyncpa [#allocation4], 0
    %9 = vsyncpa [#allocation7], 0
    %s10 = scalar_lea.sflag [#allocation7], 1
    %11 = vsyncpa %s10, 0
    %12 = vsyncpa [#allocation5], 0
    %s13 = scalar_lea.sflag [#allocation5], 1
    %14 = vsyncpa %s13, 0
    loop: start=0, step=1, limit=4
    $region2: #{tpu_custom_call.1} parent=1 // loop_pre_header
      _
    $region3: #{tpu_custom_call.1} parent=1 // loop_header
      %s16 = sphi 0, %s20
      %p17 = scmp.ge.s32.totalorder %s16, 4
      %s24 = sphi 0, %s24
      %s26 = sphi 0, %s24
      %s27 = sphi 0, %s26
      %s41 = sphi 0, %s27
      %s45 = sphi 0, %s45
      %s47 = sphi 0, %s45
      %s48 = sphi 0, %s47
      %s62 = sphi 0, %s48
      %s68 = sphi 0, %s70
      %s71 = sphi 0, %s68
      %s72 = sphi 0, %s71
      %s88 = sphi 0, %s72
      %s94 = sphi 0, %s96
      %s97 = sphi 0, %s94
      %s98 = sphi 0, %s97
      %s114 = sphi 0, %s98
    $region4: #{tpu_custom_call.1} parent=1 // loop_header_branch
      %19 = sbr.rel (%p17) target = $region8
    $region5: #{tpu_custom_call.1} parent=1 // loop_body
      %s21 = ssub.s32 %s16, 1
      %s22 = ssub.s32 %s16, 2
      %s23 = sadd.s32 %s16, 1
      %s25 = sadd.s32 %s24, 1
      %p28 = scmp.eq.s32.totalorder %s16, 1
      %p29 = scmp.ne.s32.totalorder %s24, %s26
      %p30 = scmp.eq.s32.totalorder %s16, 0
      %p31 = por %p29, %p30
      %p32 = scmp.ne.s32.totalorder %s24, %s26
      %p33 = scmp.eq.s32.totalorder %s21, 1
      %p34 = por %p32, %p33
      %p35 = scmp.ne.s32.totalorder %s26, %s27
      %p36 = scmp.eq.s32.totalorder %s21, 0
      %p37 = por %p35, %p36
      %p38 = scmp.ne.s32.totalorder %s26, %s27
      %p39 = scmp.eq.s32.totalorder %s22, 1
      %p40 = por %p38, %p39
      %p42 = scmp.ne.s32.totalorder %s27, %s41
      %p43 = scmp.eq.s32.totalorder %s22, 0
      %p44 = por %p42, %p43
      %s46 = sadd.s32 %s45, 1
      %p49 = scmp.eq.s32.totalorder %s16, 1
      %p50 = scmp.ne.s32.totalorder %s45, %s47
      %p51 = scmp.eq.s32.totalorder %s16, 0
      %p52 = por %p50, %p51
      %p53 = scmp.ne.s32.totalorder %s45, %s47
      %p54 = scmp.eq.s32.totalorder %s21, 1
      %p55 = por %p53, %p54
      %p56 = scmp.ne.s32.totalorder %s47, %s48
      %p57 = scmp.eq.s32.totalorder %s21, 0
      %p58 = por %p56, %p57
      %p59 = scmp.ne.s32.totalorder %s47, %s48
      %p60 = scmp.eq.s32.totalorder %s22, 1
      %p61 = por %p59, %p60
      %p63 = scmp.ne.s32.totalorder %s48, %s62
      %p64 = scmp.eq.s32.totalorder %s22, 0
      %p65 = por %p63, %p64
      %s66 = ssub.s32 %s16, %s23
      %p67 = scmp.eq.s32.totalorder %s66, 0
      %s69 = sadd.s32 %s68, 1
      %s70 = scalar_select %p67, %s68, %s69
      %p73 = pneg %p67
      %p74 = scmp.eq.s32.totalorder %s16, 1
      %p75 = por %p73, %p74
      %p76 = scmp.ne.s32.totalorder %s68, %s71
      %p77 = scmp.eq.s32.totalorder %s16, 0
      %p78 = por %p76, %p77
      %p79 = scmp.ne.s32.totalorder %s68, %s71
      %p80 = scmp.eq.s32.totalorder %s21, 1
      %p81 = por %p79, %p80
      %p82 = scmp.ne.s32.totalorder %s71, %s72
      %p83 = scmp.eq.s32.totalorder %s21, 0
      %p84 = por %p82, %p83
      %p85 = scmp.ne.s32.totalorder %s71, %s72
      %p86 = scmp.eq.s32.totalorder %s22, 1
      %p87 = por %p85, %p86
      %p89 = scmp.ne.s32.totalorder %s72, %s88
      %p90 = scmp.eq.s32.totalorder %s22, 0
      %p91 = por %p89, %p90
      %s92 = ssub.s32 %s16, %s23
      %p93 = scmp.eq.s32.totalorder %s92, 0
      %s95 = sadd.s32 %s94, 1
      %s96 = scalar_select %p93, %s94, %s95
      %p99 = pneg %p93
      %p100 = scmp.eq.s32.totalorder %s16, 1
      %p101 = por %p99, %p100
      %p102 = scmp.ne.s32.totalorder %s94, %s97
      %p103 = scmp.eq.s32.totalorder %s16, 0
      %p104 = por %p102, %p103
      %p105 = scmp.ne.s32.totalorder %s94, %s97
      %p106 = scmp.eq.s32.totalorder %s21, 1
      %p107 = por %p105, %p106
      %p108 = scmp.ne.s32.totalorder %s97, %s98
      %p109 = scmp.eq.s32.totalorder %s21, 0
      %p110 = por %p108, %p109
      %p111 = scmp.ne.s32.totalorder %s97, %s98
      %p112 = scmp.eq.s32.totalorder %s22, 1
      %p113 = por %p111, %p112
      %p115 = scmp.ne.s32.totalorder %s98, %s114
      %p116 = scmp.eq.s32.totalorder %s22, 0
      %p117 = por %p115, %p116
      %p118 = scmp.le.s32.totalorder 1, %s16
      %p119 = scmp.lt.s32.totalorder %s16, 3
      %p120 = pnand %p118, %p119
      %p121 = pneg %p120
      // Predicated region
      $region9: #{tpu_custom_call.1} parent=5 // pred_check
        _
      $region10: #{tpu_custom_call.1} parent=5 // pred_check_branch
        %123 = sbr.rel (%p120) target = $region12
      $region11: #{tpu_custom_call.1} parent=5 // pred_region
        %s124 = ssub.s32 %s16, 1
        // Predicated region
        $region13: #{tpu_custom_call.1} parent=11 // pred_check
          %p125 = pneg %p37
        $region14: #{tpu_custom_call.1} parent=11 // pred_check_branch
          %127 = sbr.rel (%p125) target = $region16
        $region15: #{tpu_custom_call.1} parent=11 // pred_region
          %s129 = ssub.s32 64, 64
          %130 = vsyncadd [#allocation4], %s129
          %s132 = sshll.u32 [#allocation3], 4
          %s133 = int_to_ptr.vmem [resolvable:$true] %s132
          %135 = dma.hbm_to_vmem [thread:$0]  %s0, 64, %s133, [#allocation4]
        $region16: #{tpu_custom_call.1} parent=11 // pred_fallthru
          _
        // Predicated region
        $region17: #{tpu_custom_call.1} parent=11 // pred_check
          %p136 = pneg %p58
        $region18: #{tpu_custom_call.1} parent=11 // pred_check_branch
          %138 = sbr.rel (%p136) target = $region20
        $region19: #{tpu_custom_call.1} parent=11 // pred_region
          _
        $region20: #{tpu_custom_call.1} parent=11 // pred_fallthru
          _
      $region12: #{tpu_custom_call.1} parent=5 // pred_fallthru
        _
      %p139 = scmp.lt.s32.totalorder %s16, 2
      // Predicated region
      $region21: #{tpu_custom_call.1} parent=5 // pred_check
        %p140 = pneg %p139
      $region22: #{tpu_custom_call.1} parent=5 // pred_check_branch
        %142 = sbr.rel (%p140) target = $region24
      $region23: #{tpu_custom_call.1} parent=5 // pred_region
        // Predicated region
        $region25: #{tpu_custom_call.1} parent=23 // pred_check
          %p143 = pneg %p78
        $region26: #{tpu_custom_call.1} parent=23 // pred_check_branch
          %145 = sbr.rel (%p143) target = $region28
        $region27: #{tpu_custom_call.1} parent=23 // pred_region
          %s146 = sand.u32 %s68, 1
          %s147 = scalar_lea.sflag [#allocation7], %s146
          %s148 = sand.u32 %s68, 1
          %s149 = smul.addr %s148, 8
          %s150 = scalar_lea.vmem [#allocation6], %s149
          %s152 = ssub.s32 128, 128
          %153 = vsyncadd %s147, %s152
          %s154 = smul.addr %s16, 2
          %s155 = smul.addr %s154, 64
          %s156 = scalar_lea.hbm %s2, %s155
          %s158 = sshll.u32 %s150, 4
          %s159 = int_to_ptr.vmem [resolvable:$true] %s158
          %161 = dma.hbm_to_vmem [thread:$0]  %s156, 128, %s159, %s147
        $region28: #{tpu_custom_call.1} parent=23 // pred_fallthru
          _
      $region24: #{tpu_custom_call.1} parent=5 // pred_fallthru
        _
      %p162 = scmp.le.s32.totalorder 1, %s16
      %p163 = scmp.lt.s32.totalorder %s16, 3
      %p164 = pnand %p162, %p163
      %p165 = pneg %p164
      // Predicated region
      $region29: #{tpu_custom_call.1} parent=5 // pred_check
        _
      $region30: #{tpu_custom_call.1} parent=5 // pred_check_branch
        %167 = sbr.rel (%p164) target = $region32
      $region31: #{tpu_custom_call.1} parent=5 // pred_region
        %s168 = ssub.s32 %s16, 1
        // Predicated region
        $region33: #{tpu_custom_call.1} parent=31 // pred_check
          %p169 = pneg %p37
        $region34: #{tpu_custom_call.1} parent=31 // pred_check_branch
          %171 = sbr.rel (%p169) target = $region36
        $region35: #{tpu_custom_call.1} parent=31 // pred_region
          %172 = dma.done [#allocation4], 64
        $region36: #{tpu_custom_call.1} parent=31 // pred_fallthru
          _
        %s173 = sand.u32 %s71, 1
        %s174 = scalar_lea.sflag [#allocation7], %s173
        %s175 = sand.u32 %s71, 1
        %s176 = smul.addr %s175, 8
        %s177 = scalar_lea.vmem [#allocation6], %s176
        // Predicated region
        $region37: #{tpu_custom_call.1} parent=31 // pred_check
          %p178 = pneg %p84
        $region38: #{tpu_custom_call.1} parent=31 // pred_check_branch
          %180 = sbr.rel (%p178) target = $region40
        $region39: #{tpu_custom_call.1} parent=31 // pred_region
          %181 = dma.done %s174, 128
        $region40: #{tpu_custom_call.1} parent=31 // pred_fallthru
          _
        %p182 = pneg %p37
        %p183 = pneg %p34
        %p184 = pneg %p58
        %p185 = pneg %p55
        %s186 = sand.u32 %s71, 1
        %s187 = scalar_lea.sflag [#allocation7], %s186
        %s188 = sand.u32 %s71, 1
        %s189 = smul.addr %s188, 8
        %s190 = scalar_lea.vmem [#allocation6], %s189
        %p191 = pneg %p84
        %p192 = pneg %p81
        %p193 = pneg %p110
        %p194 = pneg %p107
        %s195 = sand.u32 %s97, 1
        %s196 = scalar_lea.sflag [#allocation5], %s195
        %s197 = sand.u32 %s97, 1
        %s198 = smul.addr %s197, 2
        %s199 = scalar_lea.vmem [#allocation8], %s198
        %v200 = vld [vmem:[%s177] sm:$0xff]
        %v201 = vmax.f32 %v200, 0.0
        %v203 = vcombine.high %v201, %v201
        %vm205 = vcmask 1043456
        %v206 = vsel %vm205, %v201, -inf
        %v207 = vsel %vm205, %v203, -inf
        %v208 = vmax.f32 %v206, %v207
        %209 = vmax.xlane.f32.xlu0 %v208
        %v210 = vpop.xlane.xlu0 %209
        %v211 = vrot.slane %v210, 4
        %v212 = vmax.f32 %v210, %v211
        %v213 = vrot.slane %v212, 2
        %v214 = vmax.f32 %v212, %v213
        %v215 = vrot.slane %v214, 1
        %v216 = vmax.f32 %v214, %v215
        %s217 = vtos %v216
        %v218 = vstv %s217
        %v219 = vrcp.pop %v218
        %s220 = vtos %v219
        %v221 = vstv %s220
        %v222 = vmul.f32 %v201, %v221
        %v223 = vmul.f32 %v222, 1.442695
        %v224 = vpow.pop %v223
        %v225 = vld [vmem:[#allocation3] sm:$0xf]
        %v226 = vld [vmem:[%s1] sm:$0x3]
        %v228 = vlaneseq
        %v229 = vshrl.u32 %v228, 7
        %v230 = vsub.s32 0, %v229
        %v231 = vrot.slane %v226, %v230
        %v232 = vlaneseq
        %v233 = vshrl.u32 %v232, 7
        %v234 = vsub.s32 1, %v233
        %v235 = vrot.slane %v226, %v234
        %v236 = vcombine.low %v231, %v235
        %v238 = vadd.f32 %v224, %v236
        %v240 = vcombine.high %v224, %v224
        %242 = vrot.lane.b32.xlu0 %v224, 1
        %v243 = vpop.permute.xlu0 %242
        %244 = vrot.lane.b32.xlu0 %v240, 1
        %v245 = vpop.permute.xlu0 %244
        %v246 = vlaneseq
        %v247 = vand.u32 %v246, 127
        %vm248 = vcmp.lt.s32.totalorder %v247, 1
        %v249 = vsel %vm248, %v243, %v245
        %v250 = vsel %vm248, %v245, %v243
        %v252 = vlaneseq
        %v253 = vshrl.u32 %v252, 7
        %v254 = vsub.s32 0, %v253
        %v255 = vrot.slane %v225, %v254
        %v256 = vlaneseq
        %v257 = vshrl.u32 %v256, 7
        %v258 = vsub.s32 2, %v257
        %v259 = vrot.slane %v225, %v258
        %v262 = vlaneseq
        %v263 = vshrl.u32 %v262, 7
        %v264 = vsub.s32 0, %v263
        %v265 = vrot.slane %v255, %v264
        %v266 = vlaneseq
        %v267 = vshrl.u32 %v266, 7
        %v268 = vsub.s32 0, %v267
        %v269 = vrot.slane %v259, %v268
        %v270 = vmul.f32 %v265, %v250
        %v271 = vmul.f32 %v269, %v249
        %v274 = vcombine.low %v270, %v271
        %v276 = vadd.f32 %v238, %v274
        %277 = vrot.lane.b32.xlu0 %v224, 127
        %v278 = vpop.permute.xlu0 %277
        %279 = vrot.lane.b32.xlu0 %v240, 127
        %v280 = vpop.permute.xlu0 %279
        %vm281 = vcmp.lt.s32.totalorder %v247, 127
        %v282 = vsel %vm281, %v278, %v280
        %v283 = vsel %vm281, %v280, %v278
        %v284 = vlaneseq
        %v285 = vshrl.u32 %v284, 7
        %v286 = vsub.s32 1, %v285
        %v287 = vrot.slane %v225, %v286
        %v288 = vlaneseq
        %v289 = vshrl.u32 %v288, 7
        %v290 = vsub.s32 3, %v289
        %v291 = vrot.slane %v225, %v290
        %v294 = vlaneseq
        %v295 = vshrl.u32 %v294, 7
        %v296 = vsub.s32 1, %v295
        %v297 = vrot.slane %v287, %v296
        %v298 = vlaneseq
        %v299 = vshrl.u32 %v298, 7
        %v300 = vsub.s32 1, %v299
        %v301 = vrot.slane %v291, %v300
        %v302 = vmul.f32 %v297, %v282
        %v303 = vmul.f32 %v301, %v283
        %v306 = vcombine.low %v302, %v303
        %v308 = vadd.f32 %v276, %v306
        %vm309 = vcmask 125952
        %310 = vst.msk [vmem:[#allocation2] sm:$0xf] %vm309, 3.0
        %vm311 = vcmask 257152
        %312 = vst.msk [vmem:[#allocation2 + $0x8] sm:$0xf] %vm311, 3.0
        %314 = vrot.lane.b32.xlu0 %v308, 16
        %v315 = vpop.permute.xlu0 %314
        %v316 = vrot.slane %v315, 4
        %vm317 = vcmask 130048
        %v318 = vsel %vm317, %v316, %v315
        %vm321 = vcmask 1043584
        %vm322 = vcmask 1047556
        %vm323 = vmor %vm322, %vm321
        %324 = vst.msk [vmem:[#allocation2] sm:$0xff] %vm323, %v318
        %325 = vst.msk [vmem:[#allocation2 + $0x8] sm:$0xf] %vm309, %v316
        %v326 = vld [vmem:[#allocation2] sm:$0xff]
        %v327 = vadd.f32 %v308, %v326
        %v328 = vld [vmem:[#allocation2 + $0x8] sm:$0xf]
        %331 = vrot.lane.b32.xlu0 %v326, 96
        %v332 = vpop.permute.xlu0 %331
        %333 = vrot.lane.b32.xlu0 %v328, 96
        %v334 = vpop.permute.xlu0 %333
        %v335 = vrot.slane %v332, 4
        %v336 = vrot.slane %v334, 4
        %v337 = vsel %vm205, %v335, %v336
        %vm338 = vcmask 785408
        %v339 = vsel %vm338, %v332, %v337
        %v341 = vadd.f32 %v327, %v339
        %v342 = vrcp.pop %v341
        %v343 = vmul.f32 %v224, %v201
        %v344 = vmul.f32 %v343, %v342
        %v346 = vcombine.high %v344, %v344
        %v348 = vsel %vm205, %v344, -inf
        %v349 = vrot.slane %v348, 4
        %v350 = vmax.f32 %v348, %v349
        %v351 = vrot.slane %v350, 2
        %v352 = vmax.f32 %v350, %v351
        %v353 = vrot.slane %v352, 1
        %v354 = vmax.f32 %v352, %v353
        %v355 = vsel %vm205, %v346, -inf
        %v356 = vrot.slane %v355, 4
        %v357 = vmax.f32 %v355, %v356
        %v358 = vrot.slane %v357, 2
        %v359 = vmax.f32 %v357, %v358
        %v360 = vrot.slane %v359, 1
        %v361 = vmax.f32 %v359, %v360
        %v362 = vrot.slane %v206, 4
        %v363 = vmax.f32 %v206, %v362
        %v364 = vrot.slane %v363, 2
        %v365 = vmax.f32 %v363, %v364
        %v366 = vrot.slane %v365, 1
        %v367 = vmax.f32 %v365, %v366
        %v368 = vrot.slane %v207, 4
        %v369 = vmax.f32 %v207, %v368
        %v370 = vrot.slane %v369, 2
        %v371 = vmax.f32 %v369, %v370
        %v372 = vrot.slane %v371, 1
        %v373 = vmax.f32 %v371, %v372
        %v374 = vrcp.pop %v367
        %v375 = vmul.f32 %v354, %v374
        %v376 = vrcp.pop %v373
        %v377 = vmul.f32 %v361, %v376
        %vm378 = vcmask 1040384
        %v379 = vsel %vm378, %v375, 0.0
        %v380 = vsel %vm378, %v377, 0.0
        %v381 = vadd.f32 %v379, %v380
        %382 = vadd.xlane.f32.xlu0 %v381
        %v383 = vpop.xlane.xlu0 %382
        %v384 = vrot.slane %v383, 4
        %v385 = vadd.f32 %v383, %v384
        %v386 = vrot.slane %v385, 2
        %v387 = vadd.f32 %v385, %v386
        %v388 = vrot.slane %v387, 1
        %v389 = vadd.f32 %v387, %v388
        %s390 = vtos %v389
        %v391 = vstv %s390
        %v392 = vrcp.pop %v391
        %s393 = vtos %v392
        %v394 = vstv %s393
        %v395 = vmul.f32 %v375, %v394
        %v396 = vmul.f32 %v377, %v394
        %v399 = vcombine.low %v395, %v396
        %v401 = vunpack.c.l.s4 1966171168
        %v402 = vunpack.c.0.s8 %v401
        %v403 = vlaneseq
        %v404 = vshrl.u32 %v403, 7
        %v405 = vsub.s32 %v402, %v404
        %v406 = vrot.slane %v399, %v405
        %v408 = vunpack.c.l.s4 1966171168
        %v409 = vunpack.c.0.s8 %v408
        %v410 = vlaneseq
        %v411 = vshrl.u32 %v410, 7
        %v412 = vsub.s32 %v409, %v411
        %v413 = vrot.slane %v406, %v412
        %v415 = vlaneseq
        %vm416 = vcmp.ge.s32.totalorder %v415, 0
        %vm417 = vcmp.lt.s32.totalorder %v415, 256
        %vm418 = vmand %vm416, %vm417
        %419 = vst.msk [vmem:[%s199] sm:$0x3] %vm418, %v413
        %s420 = sand.u32 %s97, 1
        %s421 = scalar_lea.sflag [#allocation5], %s420
        %s422 = sand.u32 %s97, 1
        %s423 = smul.addr %s422, 2
        %s424 = scalar_lea.vmem [#allocation8], %s423
        // Predicated region
        $region41: #{tpu_custom_call.1} parent=31 // pred_check
          %p425 = pneg %p107
        $region42: #{tpu_custom_call.1} parent=31 // pred_check_branch
          %427 = sbr.rel (%p425) target = $region44
        $region43: #{tpu_custom_call.1} parent=31 // pred_region
          %s429 = ssub.s32 32, 32
          %430 = vsyncadd %s421, %s429
          %s431 = smul.addr %s21, 2
          %s432 = smul.addr %s431, 16
          %s433 = scalar_lea.hbm %s3, %s432
          %s435 = sshll.u32 %s424, 4
          %s436 = int_to_ptr.vmem [resolvable:$true] %s435
          %438 = dma.vmem_to_hbm [thread:$0]  %s436, 32, %s433, %s421
        $region44: #{tpu_custom_call.1} parent=31 // pred_fallthru
          _
      $region32: #{tpu_custom_call.1} parent=5 // pred_fallthru
        _
      %p439 = scmp.le.s32.totalorder 2, %s16
      // Predicated region
      $region45: #{tpu_custom_call.1} parent=5 // pred_check
        %p440 = pneg %p439
      $region46: #{tpu_custom_call.1} parent=5 // pred_check_branch
        %442 = sbr.rel (%p440) target = $region48
      $region47: #{tpu_custom_call.1} parent=5 // pred_region
        %s443 = ssub.s32 %s16, 2
        // Predicated region
        $region49: #{tpu_custom_call.1} parent=47 // pred_check
          %p444 = pneg %p113
        $region50: #{tpu_custom_call.1} parent=47 // pred_check_branch
          %446 = sbr.rel (%p444) target = $region52
        $region51: #{tpu_custom_call.1} parent=47 // pred_region
          %s447 = sand.u32 %s98, 1
          %s448 = scalar_lea.sflag [#allocation5], %s447
          %s449 = sand.u32 %s98, 1
          %s450 = smul.addr %s449, 2
          %s451 = scalar_lea.vmem [#allocation8], %s450
          %452 = dma.done %s448, 32
        $region52: #{tpu_custom_call.1} parent=47 // pred_fallthru
          _
      $region48: #{tpu_custom_call.1} parent=5 // pred_fallthru
        _
    $region6: #{tpu_custom_call.1} parent=1 // loop_footer
      %s20 = sadd.s32 1, %s16
    $region7: #{tpu_custom_call.1} parent=1 // loop_footer_branch
      %15 = sbr.rel target = $region3
    $region8: #{tpu_custom_call.1} parent=1 // loop_exit
      _
    %453 = vsyncpa [#allocation4], 1
    %s454 = scalar_lea.sflag [#allocation4], 1
    %455 = vsyncpa %s454, 1
    %456 = vsyncpa [#allocation7], 1
    %s457 = scalar_lea.sflag [#allocation7], 1
    %458 = vsyncpa %s457, 1
    %459 = vsyncpa [#allocation5], 1
    %s460 = scalar_lea.sflag [#allocation5], 1
    %461 = vsyncpa %s460, 1

</llo_original>
